<compile_context>
chip_gen: v6e
topology: v6e:2x2x1
jax: 0.10.0
libtpu: 0.0.40
codegen_flags: <defaults>
</compile_context>

<pallas_src>
import functools
import math

import numpy as np

import jax
import jax.numpy as jnp
from jax.experimental import pallas as pl
from jax.experimental.pallas import tpu as pltpu

_LANE = 128


def _round_up(v, m):
    return ((v + m - 1) // m) * m


# ------------------------------ Pallas kernel --------------------------------

def _fused_net_kernel(p1t_ref, w1f_ref, a2_ref, out_ref, *, block_cols):
    """conv1(+bias) -> SiLU -> conv2 -> SiLU, fully fused, VMEM resident.

    p1t_ref : [K1+1, M1p]      transposed im2col patches of the input, last row = 1s
    w1f_ref : [C1,  K1+1]      conv1 weight (cin,kh,kw flattened) + bias column
    a2_ref  : [M1p, C1*NP]     conv2 folded (gather x weight) matrix, 128-wide blocks
    out_ref : [2, C1+1, M1p]   rows 0..C1-1: conv1 pre/post-act (lane-dense);
                               row C1 lanes [0:NP): conv2 pre/post-act
    """
    # ---- conv1 (bias folded into the contraction), M1p=256 on the lane axis ----
    y1 = jnp.dot(w1f_ref[...], p1t_ref[...],
                 preferred_element_type=jnp.float32)            # [C1, M1p]
    x1 = y1 * jax.nn.sigmoid(y1)                                # SiLU / swish
    c1 = y1.shape[0]
    out_ref[0, 0:c1, :] = y1
    out_ref[1, 0:c1, :] = x1

    # ---- conv2: ONE MXU contraction over M1p, then a block-diagonal read-out ---
    # z[c, c*NP + q] is the contribution of input channel c to output column q.
    z = jnp.dot(x1, a2_ref[...], preferred_element_type=jnp.float32)   # [C1, C1*NP]
    y2 = z[0:1, 0:block_cols]
    for c in range(1, c1):                                      # 3 tiny VPU adds
        y2 = y2 + z[c:c + 1, c * block_cols:(c + 1) * block_cols]
    x3 = y2 * jax.nn.sigmoid(y2)                                # SiLU / swish
    out_ref[0, c1:c1 + 1, 0:block_cols] = y2
    out_ref[1, c1:c1 + 1, 0:block_cols] = x3


# --------------------------- one-time weight prep -----------------------------

def _conv1_gather_indices(n, c, h, w, kh, kw, stride, m_pad):
    """idx[K1+1, m_pad] of flat indices into concat([x.ravel(), 1.0]).

    Rows 0..K1-1 / cols 0..M1-1 index real input patches (k ordered (cin,kh,kw),
    m ordered (n,ho,wo)); every other entry points at the appended 1.0 (the last
    row realizes the folded bias, padded columns are harmless and cropped later).
    """
    ho = (h - kh) // stride + 1
    wo = (w - kw) // stride + 1
    m1 = n * ho * wo
    k1 = c * kh * kw
    kc, ki, kj = np.unravel_index(np.arange(k1), (c, kh, kw))
    mn, mi, mj = np.unravel_index(np.arange(m1), (n, ho, wo))
    flat = (((mn[None, :] * c + kc[:, None]) * h
             + (stride * mi[None, :] + ki[:, None])) * w
            + (stride * mj[None, :] + kj[:, None]))
    sentinel = n * c * h * w                     # index of the appended 1.0
    idx = np.full((k1 + 1, m_pad), sentinel, np.int32)
    idx[:k1, :m1] = flat
    return idx, ho, wo, m1, k1


def _conv2_folded_matrix(w2_np, n, ho1, wo1, stride, m1_pad, nout_pad):
    """A2[M1p, C2in*NP]: conv2 as a dense matrix acting on the conv1 activation.

    A2[m, cin*NP + q] with q = ((n*C2out + cout)*HO2 + ho)*WO2 + wo, so the
    kernel's conv2 output is already in (n, cout, ho, wo) order (no host
    transpose).  Rows m >= M1 are zero, so the padded conv1 columns cannot leak.
    """
    c2out, c2in, kh, kw = w2_np.shape
    ho2 = (ho1 - kh) // stride + 1
    wo2 = (wo1 - kw) // stride + 1
    a2 = np.zeros((m1_pad, c2in * nout_pad), np.float32)
    for nn in range(n):
        for ho in range(ho2):
            for wo in range(wo2):
                for i in range(kh):
                    for j in range(kw):
                        m = (nn * ho1 + stride * ho + i) * wo1 + (stride * wo + j)
                        for cin in range(c2in):
                            for cout in range(c2out):
                                q = ((nn * c2out + cout) * ho2 + ho) * wo2 + wo
                                a2[m, cin * nout_pad + q] += w2_np[cout, cin, i, j]
    return a2, ho2, wo2


# ------------------------------- model wrapper --------------------------------

class ShiftNegativeActivationNetPallas:
    """Weight prep happens ONCE here; __call__ runs the fused Pallas forward."""

    def __init__(self, w1, b1, w2, input_shape, stride=2):
        n, c1in, h, w = input_shape
        c1out, _, kh1, kw1 = w1.shape
        c2out, c2in, kh2, kw2 = w2.shape
        assert c2in == c1out, "conv2 input channels must match conv1 output channels"

        self.n, self.c1out, self.c2out, self.stride = n, c1out, c2out, stride

        # conv1: gather indices + weight with folded bias (numpy, one-time).
        ho1 = (h - kh1) // stride + 1
        wo1 = (w - kw1) // stride + 1
        m1_pad = _round_up(n * ho1 * wo1, _LANE)                 # 200 -> 256
        idx, ho1, wo1, m1, k1 = _conv1_gather_indices(
            n, c1in, h, w, kh1, kw1, stride, m1_pad)
        w1f = np.concatenate(
            [np.asarray(w1, np.float32).reshape(c1out, k1),
             np.asarray(b1, np.float32).reshape(c1out, 1)], axis=1)   # [C1, K1+1]

        # conv2: folded (one-hot gather x weight) matrix (numpy, one-time).
        ho2 = (ho1 - kh2) // stride + 1
        wo2 = (wo1 - kw2) // stride + 1
        nout = n * c2out * ho2 * wo2                              # 40
        nout_pad = _round_up(nout, _LANE)                         # 128
        a2, ho2, wo2 = _conv2_folded_matrix(
            np.asarray(w2, np.float32), n, ho1, wo1, stride, m1_pad, nout_pad)

        self.ho1, self.wo1, self.m1, self.m1_pad = ho1, wo1, m1, m1_pad
        self.ho2, self.wo2, self.nout, self.nout_pad = ho2, wo2, nout, nout_pad

        self.idx = jnp.asarray(idx)                               # [K1+1, M1p] i32
        self.w1f = jnp.asarray(w1f)                               # [C1, K1+1]  f32
        self.a2 = jnp.asarray(a2)                                 # [M1p, C1*NP] f32

        flops = 2 * c1out * (k1 + 1) * m1_pad + 2 * c1out * m1_pad * (c1out * nout_pad)
        transc = c1out * m1_pad + nout_pad
        byts = 4 * ((k1 + 1) * m1_pad + c1out * (k1 + 1)
                    + m1_pad * c1out * nout_pad + 2 * (c1out + 1) * m1_pad)
        self._cost = pl.CostEstimate(flops=flops, transcendentals=transc,
                                     bytes_accessed=byts)
        self._kernel = functools.partial(_fused_net_kernel, block_cols=nout_pad)
        self._fwd = jax.jit(self._forward)

    # Per-call work: gather -> single fused pallas_call -> crops/reshapes.
    def _forward(self, x, idx, w1f, a2):
        x_aug = jnp.concatenate([x.reshape(-1), jnp.ones((1,), x.dtype)])
        p1t = jnp.take(x_aug, idx)                                # [K1+1, M1p]

        vmem = pl.BlockSpec(memory_space=pltpu.MemorySpace.VMEM)
        out = pl.pallas_call(
            self._kernel,
            out_shape=jax.ShapeDtypeStruct((2, self.c1out + 1, self.m1_pad),
                                           jnp.float32),
            in_specs=[vmem, vmem, vmem],
            out_specs=vmem,
            cost_estimate=self._cost,
        )(p1t, w1f, a2)

        n, ho1, wo1 = self.n, self.ho1, self.wo1
        x0 = out[0, :self.c1out, :self.m1].reshape(
            self.c1out, n, ho1, wo1).transpose(1, 0, 2, 3)
        x1 = out[1, :self.c1out, :self.m1].reshape(
            self.c1out, n, ho1, wo1).transpose(1, 0, 2, 3)
        x2 = out[0, self.c1out, :self.nout].reshape(n, self.c2out, self.ho2, self.wo2)
        x3 = out[1, self.c1out, :self.nout].reshape(n, self.c2out, self.ho2, self.wo2)
        return x, x0, x1, x2, x3

    def __call__(self, x):
        return self._fwd(x, self.idx, self.w1f, self.a2)


# --------------------------------- reference ----------------------------------

def _ref_forward(x, w1, b1, w2):
    dn = ("NCHW", "OIHW", "NCHW")
    x0 = jax.lax.conv_general_dilated(x, w1, (2, 2), "VALID",
                                      dimension_numbers=dn) + b1[None, :, None, None]
    x1 = x0 * jax.nn.sigmoid(x0)
    x2 = jax.lax.conv_general_dilated(x1, w2, (2, 2), "VALID", dimension_numbers=dn)
    x3 = x2 * jax.nn.sigmoid(x2)
    return x, x0, x1, x2, x3


# ----------------------------------- main --------------------------------------

if __name__ == "__main__":
    key = jax.random.PRNGKey(0)
    k_w1, k_b1, k_w2, k_x = jax.random.split(key, 4)

    # Deterministic PyTorch-style init: U(-1/sqrt(fan_in), 1/sqrt(fan_in)).
    fan1 = 3 * 5 * 6
    bnd1 = 1.0 / math.sqrt(fan1)
    w1 = jax.random.uniform(k_w1, (4, 3, 5, 6), jnp.float32, -bnd1, bnd1)
    b1 = jax.random.uniform(k_b1, (4,), jnp.float32, -bnd1, bnd1)

    fan2 = 4 * 8 * 7
    bnd2 = 1.0 / math.sqrt(fan2)
    w2 = jax.random.uniform(k_w2, (5, 4, 8, 7), jnp.float32, -bnd2, bnd2)

    # NCHW input; 24x24 -> (10,10) after conv1 -> (2,2) after conv2.
    x = jax.random.normal(k_x, (2, 3, 24, 24), jnp.float32)

    net = ShiftNegativeActivationNetPallas(w1, b1, w2, x.shape)   # one-time prep
    outs = jax.block_until_ready(net(x))

    # Sanity check against the lax reference.
    refs = _ref_forward(x, w1, b1, w2)
    expected_shapes = [(2, 3, 24, 24), (2, 4, 10, 10), (2, 4, 10, 10),
                       (2, 5, 2, 2), (2, 5, 2, 2)]
    for o, r, s in zip(outs, refs, expected_shapes):
        assert o.shape == s, (o.shape, s)
        assert jnp.allclose(o, r, atol=1e-3, rtol=1e-3), float(jnp.max(jnp.abs(o - r)))

    print("KERNEL_OK")
</pallas_src>

<mosaic_0001>
module attributes {stable_mosaic.version = 11 : i64} {
  func.func @_fused_net_kernel(%arg0: memref<91x256xf32, #tpu.memory_space<vmem>>, %arg1: memref<4x91xf32, #tpu.memory_space<vmem>>, %arg2: memref<256x512xf32, #tpu.memory_space<vmem>>, %arg3: memref<2x5x256xf32, #tpu.memory_space<vmem>>) attributes {dimension_semantics = [], scalar_prefetch = 0 : i64, scratch_operands = 0 : i64, tpu.core_type = #tpu.core_type<tc>} {
    %c0 = arith.constant 0 : index
    %c0_0 = arith.constant 0 : index
    %0 = vector.load %arg1[%c0, %c0_0] : memref<4x91xf32, #tpu.memory_space<vmem>>, vector<4x91xf32>
    %c0_1 = arith.constant 0 : index
    %c0_2 = arith.constant 0 : index
    %1 = vector.load %arg0[%c0_1, %c0_2] : memref<91x256xf32, #tpu.memory_space<vmem>>, vector<91x256xf32>
    %cst = arith.constant dense<0.000000e+00> : vector<4x256xf32>
    %2 = tpu.matmul %0, %1, %cst {dimension_numbers = #tpu.dot_dimension_numbers<[1], [0], [0], [1], [0, 0, 1, 1], [], []>} : vector<4x91xf32>, vector<91x256xf32>, vector<4x256xf32> -> vector<4x256xf32>
    %3 = arith.negf %2 : vector<4x256xf32>
    %4 = math.exp %3 : vector<4x256xf32>
    %cst_3 = arith.constant 1.000000e+00 : f32
    %5 = vector.broadcast %cst_3 : f32 to vector<4x256xf32>
    %6 = arith.addf %5, %4 : vector<4x256xf32>
    %7 = arith.divf %5, %6 : vector<4x256xf32>
    %8 = arith.mulf %2, %7 : vector<4x256xf32>
    %c0_4 = arith.constant 0 : index
    %c0_5 = arith.constant 0 : index
    %c0_6 = arith.constant 0 : index
    %9 = vector.load %arg3[%c0_4, %c0_5, %c0_6] : memref<2x5x256xf32, #tpu.memory_space<vmem>>, vector<1x4x256xf32>
    %10 = vector.shape_cast %9 : vector<1x4x256xf32> to vector<4x256xf32>
    %11 = vector.shape_cast %2 : vector<4x256xf32> to vector<1x4x256xf32>
    tpu.vector_store %arg3[%c0_4, %c0_5, %c0_6], %11 {strides = array<i32>} : memref<2x5x256xf32, #tpu.memory_space<vmem>>, vector<1x4x256xf32>,
    %c1 = arith.constant 1 : index
    %c0_7 = arith.constant 0 : index
    %c0_8 = arith.constant 0 : index
    %12 = vector.load %arg3[%c1, %c0_7, %c0_8] : memref<2x5x256xf32, #tpu.memory_space<vmem>>, vector<1x4x256xf32>
    %13 = vector.shape_cast %12 : vector<1x4x256xf32> to vector<4x256xf32>
    %14 = vector.shape_cast %8 : vector<4x256xf32> to vector<1x4x256xf32>
    tpu.vector_store %arg3[%c1, %c0_7, %c0_8], %14 {strides = array<i32>} : memref<2x5x256xf32, #tpu.memory_space<vmem>>, vector<1x4x256xf32>,
    %c0_9 = arith.constant 0 : index
    %c0_10 = arith.constant 0 : index
    %15 = vector.load %arg2[%c0_9, %c0_10] : memref<256x512xf32, #tpu.memory_space<vmem>>, vector<256x512xf32>
    %cst_11 = arith.constant dense<0.000000e+00> : vector<4x512xf32>
    %16 = tpu.matmul %8, %15, %cst_11 {dimension_numbers = #tpu.dot_dimension_numbers<[1], [0], [0], [1], [0, 0, 1, 1], [], []>} : vector<4x256xf32>, vector<256x512xf32>, vector<4x512xf32> -> vector<4x512xf32>
    %17 = vector.extract_strided_slice %16 {offsets = [0, 0], sizes = [1, 128], strides = [1, 1]} : vector<4x512xf32> to vector<1x128xf32>
    %18 = vector.extract_strided_slice %16 {offsets = [1, 128], sizes = [1, 128], strides = [1, 1]} : vector<4x512xf32> to vector<1x128xf32>
    %19 = arith.addf %17, %18 : vector<1x128xf32>
    %20 = vector.extract_strided_slice %16 {offsets = [2, 256], sizes = [1, 128], strides = [1, 1]} : vector<4x512xf32> to vector<1x128xf32>
    %21 = arith.addf %19, %20 : vector<1x128xf32>
    %22 = vector.extract_strided_slice %16 {offsets = [3, 384], sizes = [1, 128], strides = [1, 1]} : vector<4x512xf32> to vector<1x128xf32>
    %23 = arith.addf %21, %22 : vector<1x128xf32>
    %24 = arith.negf %23 : vector<1x128xf32>
    %25 = math.exp %24 : vector<1x128xf32>
    %cst_12 = arith.constant 1.000000e+00 : f32
    %26 = vector.broadcast %cst_12 : f32 to vector<1x128xf32>
    %27 = arith.addf %26, %25 : vector<1x128xf32>
    %28 = arith.divf %26, %27 : vector<1x128xf32>
    %29 = arith.mulf %23, %28 : vector<1x128xf32>
    %c0_13 = arith.constant 0 : index
    %c4 = arith.constant 4 : index
    %c0_14 = arith.constant 0 : index
    %30 = vector.load %arg3[%c0_13, %c4, %c0_14] : memref<2x5x256xf32, #tpu.memory_space<vmem>>, vector<1x1x128xf32>
    %31 = vector.shape_cast %30 : vector<1x1x128xf32> to vector<1x128xf32>
    %32 = vector.shape_cast %23 : vector<1x128xf32> to vector<1x1x128xf32>
    tpu.vector_store %arg3[%c0_13, %c4, %c0_14], %32 {strides = array<i32>} : memref<2x5x256xf32, #tpu.memory_space<vmem>>, vector<1x1x128xf32>,
    %c1_15 = arith.constant 1 : index
    %c4_16 = arith.constant 4 : index
    %c0_17 = arith.constant 0 : index
    %33 = vector.load %arg3[%c1_15, %c4_16, %c0_17] : memref<2x5x256xf32, #tpu.memory_space<vmem>>, vector<1x1x128xf32>
    %34 = vector.shape_cast %33 : vector<1x1x128xf32> to vector<1x128xf32>
    %35 = vector.shape_cast %29 : vector<1x128xf32> to vector<1x1x128xf32>
    tpu.vector_store %arg3[%c1_15, %c4_16, %c0_17], %35 {strides = array<i32>} : memref<2x5x256xf32, #tpu.memory_space<vmem>>, vector<1x1x128xf32>,
    return
  }
}

</mosaic_0001>

<llo_original>
// kernel: squeeze.4
$region0: #{squeeze.4}
  %s0 = inlined_call_operand.vmem [shape: f32[1,4,200], index: 0, kind: input, shape index: {}]
  %s1 = inlined_call_operand.vmem [shape: f32[4,2,10,10], index: 1, kind: output, shape index: {}]
  $region1: #{squeeze.4} parent=0
    #allocation0 [shape = 'u8[8192]{0}', space=vmem, size = 0x2000, scoped, tag = 'scoped mem for input reshape']
    %s3 = sshll.u32 1, 4
    %s4 = ssub.s32 %s3, 1
    %s5 = scalar_lea.vmem %s0, 4
    %v6 = vld [vmem:[%s5] sm:%s4]
    %s7 = scalar_lea.vmem [#allocation0], 8
    %8 = vst [vmem:[%s7] sm:%s4] %v6
    %v9 = vld [vmem:[%s0] sm:%s4]
    %10 = vst [vmem:[#allocation0] sm:%s4] %v9
    %v11 = vld [vmem:[#allocation0] sm:$0xf]
    %vm12 = vcmask 80896
    %13 = vst.msk [vmem:[%s1] sm:$0x1] %vm12, %v11
    %s14 = scalar_lea.vmem %s1, 31
    %15 = vst.msk [vmem:[%s14] sm:$0x2] %vm12, %v11
    %s16 = scalar_lea.vmem %s1, 62
    %17 = vst.msk [vmem:[%s16] sm:$0x4] %vm12, %v11
    %s18 = scalar_lea.vmem %s1, 93
    %19 = vst.msk [vmem:[%s18] sm:$0x8] %vm12, %v11
    %s20 = scalar_lea.vmem [#allocation0], 8
    %v21 = vld [vmem:[%s20] sm:$0xf]
    %22 = vrot.lane.b32.xlu0 %v21, 126
    %v23 = vpop.permute.xlu0 %22
    %vm24 = vcmask 80896
    %s25 = scalar_lea.vmem %s1, 19
    %26 = vst.msk [vmem:[%s25] sm:$0x1] %vm24, %v23
    %s27 = scalar_lea.vmem %s1, 50
    %28 = vst.msk [vmem:[%s27] sm:$0x2] %vm24, %v23
    %s29 = scalar_lea.vmem %s1, 81
    %30 = vst.msk [vmem:[%s29] sm:$0x4] %vm24, %v23
    %s31 = scalar_lea.vmem %s1, 112
    %32 = vst.msk [vmem:[%s31] sm:$0x8] %vm24, %v23
    %v33 = vld [vmem:[#allocation0] sm:$0xf]
    %34 = vrot.lane.b32.xlu0 %v33, 118
    %v35 = vpop.permute.xlu0 %34
    %vm36 = vcmask 80896
    %s37 = scalar_lea.vmem %s1, 1
    %38 = vst.msk [vmem:[%s37] sm:$0x1] %vm36, %v35
    %s39 = scalar_lea.vmem %s1, 32
    %40 = vst.msk [vmem:[%s39] sm:$0x2] %vm36, %v35
    %s41 = scalar_lea.vmem %s1, 63
    %42 = vst.msk [vmem:[%s41] sm:$0x4] %vm36, %v35
    %s43 = scalar_lea.vmem %s1, 94
    %44 = vst.msk [vmem:[%s43] sm:$0x8] %vm36, %v35
    %s45 = scalar_lea.vmem [#allocation0], 8
    %v46 = vld [vmem:[%s45] sm:$0xf]
    %47 = vrot.lane.b32.xlu0 %v46, 116
    %v48 = vpop.permute.xlu0 %47
    %vm49 = vcmask 80896
    %s50 = scalar_lea.vmem %s1, 20
    %51 = vst.msk [vmem:[%s50] sm:$0x1] %vm49, %v48
    %s52 = scalar_lea.vmem %s1, 51
    %53 = vst.msk [vmem:[%s52] sm:$0x2] %vm49, %v48
    %s54 = scalar_lea.vmem %s1, 82
    %55 = vst.msk [vmem:[%s54] sm:$0x4] %vm49, %v48
    %s56 = scalar_lea.vmem %s1, 113
    %57 = vst.msk [vmem:[%s56] sm:$0x8] %vm49, %v48
    %v58 = vld [vmem:[#allocation0] sm:$0xf]
    %59 = vrot.lane.b32.xlu0 %v58, 108
    %v60 = vpop.permute.xlu0 %59
    %vm61 = vcmask 80896
    %s62 = scalar_lea.vmem %s1, 2
    %63 = vst.msk [vmem:[%s62] sm:$0x1] %vm61, %v60
    %s64 = scalar_lea.vmem %s1, 33
    %65 = vst.msk [vmem:[%s64] sm:$0x2] %vm61, %v60
    %s66 = scalar_lea.vmem %s1, 64
    %67 = vst.msk [vmem:[%s66] sm:$0x4] %vm61, %v60
    %s68 = scalar_lea.vmem %s1, 95
    %69 = vst.msk [vmem:[%s68] sm:$0x8] %vm61, %v60
    %s70 = scalar_lea.vmem [#allocation0], 8
    %v71 = vld [vmem:[%s70] sm:$0xf]
    %72 = vrot.lane.b32.xlu0 %v71, 106
    %v73 = vpop.permute.xlu0 %72
    %vm74 = vcmask 80896
    %s75 = scalar_lea.vmem %s1, 21
    %76 = vst.msk [vmem:[%s75] sm:$0x1] %vm74, %v73
    %s77 = scalar_lea.vmem %s1, 52
    %78 = vst.msk [vmem:[%s77] sm:$0x2] %vm74, %v73
    %s79 = scalar_lea.vmem %s1, 83
    %80 = vst.msk [vmem:[%s79] sm:$0x4] %vm74, %v73
    %s81 = scalar_lea.vmem %s1, 114
    %82 = vst.msk [vmem:[%s81] sm:$0x8] %vm74, %v73
    %v83 = vld [vmem:[#allocation0] sm:$0xf]
    %84 = vrot.lane.b32.xlu0 %v83, 98
    %v85 = vpop.permute.xlu0 %84
    %vm86 = vcmask 80896
    %s87 = scalar_lea.vmem %s1, 3
    %88 = vst.msk [vmem:[%s87] sm:$0x1] %vm86, %v85
    %s89 = scalar_lea.vmem %s1, 34
    %90 = vst.msk [vmem:[%s89] sm:$0x2] %vm86, %v85
    %s91 = scalar_lea.vmem %s1, 65
    %92 = vst.msk [vmem:[%s91] sm:$0x4] %vm86, %v85
    %s93 = scalar_lea.vmem %s1, 96
    %94 = vst.msk [vmem:[%s93] sm:$0x8] %vm86, %v85
    %s95 = scalar_lea.vmem [#allocation0], 8
    %v96 = vld [vmem:[%s95] sm:$0xf]
    %97 = vrot.lane.b32.xlu0 %v96, 96
    %v98 = vpop.permute.xlu0 %97
    %vm99 = vcmask 80896
    %s100 = scalar_lea.vmem %s1, 22
    %101 = vst.msk [vmem:[%s100] sm:$0x1] %vm99, %v98
    %s102 = scalar_lea.vmem %s1, 53
    %103 = vst.msk [vmem:[%s102] sm:$0x2] %vm99, %v98
    %s104 = scalar_lea.vmem %s1, 84
    %105 = vst.msk [vmem:[%s104] sm:$0x4] %vm99, %v98
    %s106 = scalar_lea.vmem %s1, 115
    %107 = vst.msk [vmem:[%s106] sm:$0x8] %vm99, %v98
    %v108 = vld [vmem:[#allocation0] sm:$0xf]
    %109 = vrot.lane.b32.xlu0 %v108, 88
    %v110 = vpop.permute.xlu0 %109
    %vm111 = vcmask 80896
    %s112 = scalar_lea.vmem %s1, 4
    %113 = vst.msk [vmem:[%s112] sm:$0x1] %vm111, %v110
    %s114 = scalar_lea.vmem %s1, 35
    %115 = vst.msk [vmem:[%s114] sm:$0x2] %vm111, %v110
    %s116 = scalar_lea.vmem %s1, 66
    %117 = vst.msk [vmem:[%s116] sm:$0x4] %vm111, %v110
    %s118 = scalar_lea.vmem %s1, 97
    %119 = vst.msk [vmem:[%s118] sm:$0x8] %vm111, %v110
    %s120 = scalar_lea.vmem [#allocation0], 8
    %v121 = vld [vmem:[%s120] sm:$0xf]
    %122 = vrot.lane.b32.xlu0 %v121, 86
    %v123 = vpop.permute.xlu0 %122
    %vm124 = vcmask 80896
    %s125 = scalar_lea.vmem %s1, 23
    %126 = vst.msk [vmem:[%s125] sm:$0x1] %vm124, %v123
    %s127 = scalar_lea.vmem %s1, 54
    %128 = vst.msk [vmem:[%s127] sm:$0x2] %vm124, %v123
    %s129 = scalar_lea.vmem %s1, 85
    %130 = vst.msk [vmem:[%s129] sm:$0x4] %vm124, %v123
    %s131 = scalar_lea.vmem %s1, 116
    %132 = vst.msk [vmem:[%s131] sm:$0x8] %vm124, %v123
    %v133 = vld [vmem:[#allocation0] sm:$0xf]
    %134 = vrot.lane.b32.xlu0 %v133, 78
    %v135 = vpop.permute.xlu0 %134
    %vm136 = vcmask 80896
    %s137 = scalar_lea.vmem %s1, 5
    %138 = vst.msk [vmem:[%s137] sm:$0x1] %vm136, %v135
    %s139 = scalar_lea.vmem %s1, 36
    %140 = vst.msk [vmem:[%s139] sm:$0x2] %vm136, %v135
    %s141 = scalar_lea.vmem %s1, 67
    %142 = vst.msk [vmem:[%s141] sm:$0x4] %vm136, %v135
    %s143 = scalar_lea.vmem %s1, 98
    %144 = vst.msk [vmem:[%s143] sm:$0x8] %vm136, %v135
    %s145 = scalar_lea.vmem [#allocation0], 8
    %v146 = vld [vmem:[%s145] sm:$0xf]
    %147 = vrot.lane.b32.xlu0 %v146, 76
    %v148 = vpop.permute.xlu0 %147
    %vm149 = vcmask 80896
    %s150 = scalar_lea.vmem %s1, 24
    %151 = vst.msk [vmem:[%s150] sm:$0x1] %vm149, %v148
    %s152 = scalar_lea.vmem %s1, 55
    %153 = vst.msk [vmem:[%s152] sm:$0x2] %vm149, %v148
    %s154 = scalar_lea.vmem %s1, 86
    %155 = vst.msk [vmem:[%s154] sm:$0x4] %vm149, %v148
    %s156 = scalar_lea.vmem %s1, 117
    %157 = vst.msk [vmem:[%s156] sm:$0x8] %vm149, %v148
    %v158 = vld [vmem:[#allocation0] sm:$0xf]
    %159 = vrot.lane.b32.xlu0 %v158, 68
    %v160 = vpop.permute.xlu0 %159
    %vm161 = vcmask 80896
    %s162 = scalar_lea.vmem %s1, 6
    %163 = vst.msk [vmem:[%s162] sm:$0x1] %vm161, %v160
    %s164 = scalar_lea.vmem %s1, 37
    %165 = vst.msk [vmem:[%s164] sm:$0x2] %vm161, %v160
    %s166 = scalar_lea.vmem %s1, 68
    %167 = vst.msk [vmem:[%s166] sm:$0x4] %vm161, %v160
    %s168 = scalar_lea.vmem %s1, 99
    %169 = vst.msk [vmem:[%s168] sm:$0x8] %vm161, %v160
    %s170 = scalar_lea.vmem [#allocation0], 8
    %v171 = vld [vmem:[%s170] sm:$0xf]
    %172 = vrot.lane.b32.xlu0 %v171, 66
    %v173 = vpop.permute.xlu0 %172
    %vm174 = vcmask 80896
    %s175 = scalar_lea.vmem %s1, 25
    %176 = vst.msk [vmem:[%s175] sm:$0x1] %vm174, %v173
    %s177 = scalar_lea.vmem %s1, 56
    %178 = vst.msk [vmem:[%s177] sm:$0x2] %vm174, %v173
    %s179 = scalar_lea.vmem %s1, 87
    %180 = vst.msk [vmem:[%s179] sm:$0x4] %vm174, %v173
    %s181 = scalar_lea.vmem %s1, 118
    %182 = vst.msk [vmem:[%s181] sm:$0x8] %vm174, %v173
    %v183 = vld [vmem:[#allocation0] sm:$0xf]
    %184 = vrot.lane.b32.xlu0 %v183, 58
    %v185 = vpop.permute.xlu0 %184
    %vm186 = vcmask 80896
    %s187 = scalar_lea.vmem %s1, 7
    %188 = vst.msk [vmem:[%s187] sm:$0x1] %vm186, %v185
    %s189 = scalar_lea.vmem %s1, 38
    %190 = vst.msk [vmem:[%s189] sm:$0x2] %vm186, %v185
    %s191 = scalar_lea.vmem %s1, 69
    %192 = vst.msk [vmem:[%s191] sm:$0x4] %vm186, %v185
    %s193 = scalar_lea.vmem %s1, 100
    %194 = vst.msk [vmem:[%s193] sm:$0x8] %vm186, %v185
    %v195 = vld [vmem:[#allocation0] sm:$0xf]
    %196 = vrot.lane.b32.xlu0 %v195, 48
    %v197 = vpop.permute.xlu0 %196
    %vm198 = vcmask 80896
    %s199 = scalar_lea.vmem %s1, 8
    %200 = vst.msk [vmem:[%s199] sm:$0x1] %vm198, %v197
    %s201 = scalar_lea.vmem %s1, 39
    %202 = vst.msk [vmem:[%s201] sm:$0x2] %vm198, %v197
    %s203 = scalar_lea.vmem %s1, 70
    %204 = vst.msk [vmem:[%s203] sm:$0x4] %vm198, %v197
    %s205 = scalar_lea.vmem %s1, 101
    %206 = vst.msk [vmem:[%s205] sm:$0x8] %vm198, %v197
    %v207 = vld [vmem:[#allocation0] sm:$0xf]
    %208 = vrot.lane.b32.xlu0 %v207, 38
    %v209 = vpop.permute.xlu0 %208
    %vm210 = vcmask 80896
    %s211 = scalar_lea.vmem %s1, 9
    %212 = vst.msk [vmem:[%s211] sm:$0x1] %vm210, %v209
    %s213 = scalar_lea.vmem %s1, 40
    %214 = vst.msk [vmem:[%s213] sm:$0x2] %vm210, %v209
    %s215 = scalar_lea.vmem %s1, 71
    %216 = vst.msk [vmem:[%s215] sm:$0x4] %vm210, %v209
    %s217 = scalar_lea.vmem %s1, 102
    %218 = vst.msk [vmem:[%s217] sm:$0x8] %vm210, %v209
    %v219 = vld [vmem:[#allocation0] sm:$0xf]
    %220 = vrot.lane.b32.xlu0 %v219, 28
    %v221 = vpop.permute.xlu0 %220
    %vm222 = vcmask 80896
    %s223 = scalar_lea.vmem %s1, 16
    %224 = vst.msk [vmem:[%s223] sm:$0x1] %vm222, %v221
    %s225 = scalar_lea.vmem %s1, 47
    %226 = vst.msk [vmem:[%s225] sm:$0x2] %vm222, %v221
    %s227 = scalar_lea.vmem %s1, 78
    %228 = vst.msk [vmem:[%s227] sm:$0x4] %vm222, %v221
    %s229 = scalar_lea.vmem %s1, 109
    %230 = vst.msk [vmem:[%s229] sm:$0x8] %vm222, %v221
    %v231 = vld [vmem:[#allocation0] sm:$0xf]
    %232 = vrot.lane.b32.xlu0 %v231, 18
    %v233 = vpop.permute.xlu0 %232
    %vm234 = vcmask 80896
    %s235 = scalar_lea.vmem %s1, 17
    %236 = vst.msk [vmem:[%s235] sm:$0x1] %vm234, %v233
    %s237 = scalar_lea.vmem %s1, 48
    %238 = vst.msk [vmem:[%s237] sm:$0x2] %vm234, %v233
    %s239 = scalar_lea.vmem %s1, 79
    %240 = vst.msk [vmem:[%s239] sm:$0x4] %vm234, %v233
    %s241 = scalar_lea.vmem %s1, 110
    %242 = vst.msk [vmem:[%s241] sm:$0x8] %vm234, %v233
    %v243 = vld [vmem:[#allocation0] sm:$0xf]
    %s244 = scalar_lea.vmem [#allocation0], 8
    %v245 = vld [vmem:[%s244] sm:$0xf]
    %vm246 = vcmask 982016
    %v247 = vsel %vm246, %v245, %v243
    %248 = vrot.lane.b32.xlu0 %v247, 8
    %v249 = vpop.permute.xlu0 %248
    %vm250 = vcmask 64512
    %s251 = scalar_lea.vmem %s1, 18
    %252 = vst.msk [vmem:[%s251] sm:$0x1] %vm250, %v249
    %s253 = scalar_lea.vmem %s1, 49
    %254 = vst.msk [vmem:[%s253] sm:$0x2] %vm250, %v249
    %s255 = scalar_lea.vmem %s1, 80
    %256 = vst.msk [vmem:[%s255] sm:$0x4] %vm250, %v249
    %s257 = scalar_lea.vmem %s1, 111
    %258 = vst.msk [vmem:[%s257] sm:$0x8] %vm250, %v249
    %vm259 = vcmask 80960
    %s260 = scalar_lea.vmem %s1, 18
    %261 = vst.msk [vmem:[%s260] sm:$0x1] %vm259, %v249
    %s262 = scalar_lea.vmem %s1, 49
    %263 = vst.msk [vmem:[%s262] sm:$0x2] %vm259, %v249
    %s264 = scalar_lea.vmem %s1, 80
    %265 = vst.msk [vmem:[%s264] sm:$0x4] %vm259, %v249
    %s266 = scalar_lea.vmem %s1, 111
    %267 = vst.msk [vmem:[%s266] sm:$0x8] %vm259, %v249

// kernel: squeeze.6
$region0: #{squeeze.6}
  %s0 = inlined_call_operand.vmem [shape: f32[40], index: 0, kind: input, shape index: {}]
  %s1 = inlined_call_operand.vmem [shape: f32[2,5,2,2], index: 1, kind: output, shape index: {}]
  $region1: #{squeeze.6} parent=0
    #allocation0 [shape = 'u8[40960]{0}', space=vmem, size = 0xa000, scoped, tag = 'scoped mem for output reshape']
    #allocation1 [shape = 'u8[4096]{0}', space=vmem, size = 0x1000, scoped, tag = 'scoped mem for input reshape']
    %s3 = sshll.u32 1, 1
    %s4 = ssub.s32 %s3, 1
    %v5 = vld [vmem:[%s0] sm:%s4]
    %6 = vst [vmem:[#allocation1] sm:%s4] %v5
    %v7 = vld [vmem:[#allocation1] sm:$0x1]
    %vm8 = vcmask 15360
    %9 = vst.msk [vmem:[#allocation0] sm:$0x1] %vm8, %v7
    %v10 = vld [vmem:[#allocation1] sm:$0x1]
    %11 = vrot.lane.b32.xlu0 %v10, 126
    %v12 = vpop.permute.xlu0 %11
    %vm13 = vcmask 15360
    %s14 = scalar_lea.vmem [#allocation0], 1
    %15 = vst.msk [vmem:[%s14] sm:$0x1] %vm13, %v12
    %v16 = vld [vmem:[#allocation1] sm:$0x1]
    %17 = vrot.lane.b32.xlu0 %v16, 124
    %v18 = vpop.permute.xlu0 %17
    %vm19 = vcmask 15360
    %s20 = scalar_lea.vmem [#allocation0], 8
    %21 = vst.msk [vmem:[%s20] sm:$0x1] %vm19, %v18
    %v22 = vld [vmem:[#allocation1] sm:$0x1]
    %23 = vrot.lane.b32.xlu0 %v22, 122
    %v24 = vpop.permute.xlu0 %23
    %vm25 = vcmask 15360
    %s26 = scalar_lea.vmem [#allocation0], 9
    %27 = vst.msk [vmem:[%s26] sm:$0x1] %vm25, %v24
    %v28 = vld [vmem:[#allocation1] sm:$0x1]
    %29 = vrot.lane.b32.xlu0 %v28, 120
    %v30 = vpop.permute.xlu0 %29
    %vm31 = vcmask 15360
    %s32 = scalar_lea.vmem [#allocation0], 16
    %33 = vst.msk [vmem:[%s32] sm:$0x1] %vm31, %v30
    %v34 = vld [vmem:[#allocation1] sm:$0x1]
    %35 = vrot.lane.b32.xlu0 %v34, 118
    %v36 = vpop.permute.xlu0 %35
    %vm37 = vcmask 15360
    %s38 = scalar_lea.vmem [#allocation0], 17
    %39 = vst.msk [vmem:[%s38] sm:$0x1] %vm37, %v36
    %v40 = vld [vmem:[#allocation1] sm:$0x1]
    %41 = vrot.lane.b32.xlu0 %v40, 116
    %v42 = vpop.permute.xlu0 %41
    %vm43 = vcmask 15360
    %s44 = scalar_lea.vmem [#allocation0], 24
    %45 = vst.msk [vmem:[%s44] sm:$0x1] %vm43, %v42
    %v46 = vld [vmem:[#allocation1] sm:$0x1]
    %47 = vrot.lane.b32.xlu0 %v46, 114
    %v48 = vpop.permute.xlu0 %47
    %vm49 = vcmask 15360
    %s50 = scalar_lea.vmem [#allocation0], 25
    %51 = vst.msk [vmem:[%s50] sm:$0x1] %vm49, %v48
    %v52 = vld [vmem:[#allocation1] sm:$0x1]
    %53 = vrot.lane.b32.xlu0 %v52, 112
    %v54 = vpop.permute.xlu0 %53
    %vm55 = vcmask 15360
    %s56 = scalar_lea.vmem [#allocation0], 32
    %57 = vst.msk [vmem:[%s56] sm:$0x1] %vm55, %v54
    %v58 = vld [vmem:[#allocation1] sm:$0x1]
    %59 = vrot.lane.b32.xlu0 %v58, 110
    %v60 = vpop.permute.xlu0 %59
    %vm61 = vcmask 15360
    %s62 = scalar_lea.vmem [#allocation0], 33
    %63 = vst.msk [vmem:[%s62] sm:$0x1] %vm61, %v60
    %v64 = vld [vmem:[#allocation1] sm:$0x1]
    %65 = vrot.lane.b32.xlu0 %v64, 108
    %v66 = vpop.permute.xlu0 %65
    %vm67 = vcmask 15360
    %s68 = scalar_lea.vmem [#allocation0], 40
    %69 = vst.msk [vmem:[%s68] sm:$0x1] %vm67, %v66
    %v70 = vld [vmem:[#allocation1] sm:$0x1]
    %71 = vrot.lane.b32.xlu0 %v70, 106
    %v72 = vpop.permute.xlu0 %71
    %vm73 = vcmask 15360
    %s74 = scalar_lea.vmem [#allocation0], 41
    %75 = vst.msk [vmem:[%s74] sm:$0x1] %vm73, %v72
    %v76 = vld [vmem:[#allocation1] sm:$0x1]
    %77 = vrot.lane.b32.xlu0 %v76, 104
    %v78 = vpop.permute.xlu0 %77
    %vm79 = vcmask 15360
    %s80 = scalar_lea.vmem [#allocation0], 48
    %81 = vst.msk [vmem:[%s80] sm:$0x1] %vm79, %v78
    %v82 = vld [vmem:[#allocation1] sm:$0x1]
    %83 = vrot.lane.b32.xlu0 %v82, 102
    %v84 = vpop.permute.xlu0 %83
    %vm85 = vcmask 15360
    %s86 = scalar_lea.vmem [#allocation0], 49
    %87 = vst.msk [vmem:[%s86] sm:$0x1] %vm85, %v84
    %v88 = vld [vmem:[#allocation1] sm:$0x1]
    %89 = vrot.lane.b32.xlu0 %v88, 100
    %v90 = vpop.permute.xlu0 %89
    %vm91 = vcmask 15360
    %s92 = scalar_lea.vmem [#allocation0], 56
    %93 = vst.msk [vmem:[%s92] sm:$0x1] %vm91, %v90
    %v94 = vld [vmem:[#allocation1] sm:$0x1]
    %95 = vrot.lane.b32.xlu0 %v94, 98
    %v96 = vpop.permute.xlu0 %95
    %vm97 = vcmask 15360
    %s98 = scalar_lea.vmem [#allocation0], 57
    %99 = vst.msk [vmem:[%s98] sm:$0x1] %vm97, %v96
    %v100 = vld [vmem:[#allocation1] sm:$0x1]
    %101 = vrot.lane.b32.xlu0 %v100, 96
    %v102 = vpop.permute.xlu0 %101
    %vm103 = vcmask 15360
    %s104 = scalar_lea.vmem [#allocation0], 64
    %105 = vst.msk [vmem:[%s104] sm:$0x1] %vm103, %v102
    %v106 = vld [vmem:[#allocation1] sm:$0x1]
    %107 = vrot.lane.b32.xlu0 %v106, 94
    %v108 = vpop.permute.xlu0 %107
    %vm109 = vcmask 15360
    %s110 = scalar_lea.vmem [#allocation0], 65
    %111 = vst.msk [vmem:[%s110] sm:$0x1] %vm109, %v108
    %v112 = vld [vmem:[#allocation1] sm:$0x1]
    %113 = vrot.lane.b32.xlu0 %v112, 92
    %v114 = vpop.permute.xlu0 %113
    %vm115 = vcmask 15360
    %s116 = scalar_lea.vmem [#allocation0], 72
    %117 = vst.msk [vmem:[%s116] sm:$0x1] %vm115, %v114
    %v118 = vld [vmem:[#allocation1] sm:$0x1]
    %119 = vrot.lane.b32.xlu0 %v118, 90
    %v120 = vpop.permute.xlu0 %119
    %vm121 = vcmask 15360
    %s122 = scalar_lea.vmem [#allocation0], 73
    %123 = vst.msk [vmem:[%s122] sm:$0x1] %vm121, %v120
    %s125 = sshll.u32 1, 2
    %s126 = ssub.s32 %s125, 1
    %v128 = vld [vmem:[#allocation0] sm:%s126]
    %s129 = sshll.u32 1, 2
    %s130 = ssub.s32 %s129, 1
    %131 = vst [vmem:[%s1] sm:%s130] %v128
    %s132 = scalar_lea.vmem [#allocation0], 8
    %v133 = vld [vmem:[%s132] sm:%s126]
    %s134 = sshll.u32 1, 2
    %s135 = ssub.s32 %s134, 1
    %s136 = scalar_lea.vmem %s1, 2
    %137 = vst [vmem:[%s136] sm:%s135] %v133
    %s138 = scalar_lea.vmem [#allocation0], 16
    %v139 = vld [vmem:[%s138] sm:%s126]
    %s140 = sshll.u32 1, 2
    %s141 = ssub.s32 %s140, 1
    %s142 = smul.addr 2, 2
    %s143 = scalar_lea.vmem %s1, %s142
    %144 = vst [vmem:[%s143] sm:%s141] %v139
    %s145 = scalar_lea.vmem [#allocation0], 24
    %v146 = vld [vmem:[%s145] sm:%s126]
    %s147 = sshll.u32 1, 2
    %s148 = ssub.s32 %s147, 1
    %s149 = smul.addr 2, 3
    %s150 = scalar_lea.vmem %s1, %s149
    %151 = vst [vmem:[%s150] sm:%s148] %v146
    %s152 = scalar_lea.vmem [#allocation0], 32
    %v153 = vld [vmem:[%s152] sm:%s126]
    %s154 = sshll.u32 1, 2
    %s155 = ssub.s32 %s154, 1
    %s156 = smul.addr 2, 4
    %s157 = scalar_lea.vmem %s1, %s156
    %158 = vst [vmem:[%s157] sm:%s155] %v153
    %s159 = scalar_lea.vmem [#allocation0], 40
    %v160 = vld [vmem:[%s159] sm:%s126]
    %s161 = sshll.u32 1, 2
    %s162 = ssub.s32 %s161, 1
    %s163 = smul.addr 2, 5
    %s164 = scalar_lea.vmem %s1, %s163
    %165 = vst [vmem:[%s164] sm:%s162] %v160
    %s166 = scalar_lea.vmem [#allocation0], 48
    %v167 = vld [vmem:[%s166] sm:%s126]
    %s168 = sshll.u32 1, 2
    %s169 = ssub.s32 %s168, 1
    %s170 = smul.addr 2, 6
    %s171 = scalar_lea.vmem %s1, %s170
    %172 = vst [vmem:[%s171] sm:%s169] %v167
    %s173 = scalar_lea.vmem [#allocation0], 56
    %v174 = vld [vmem:[%s173] sm:%s126]
    %s175 = sshll.u32 1, 2
    %s176 = ssub.s32 %s175, 1
    %s177 = smul.addr 2, 7
    %s178 = scalar_lea.vmem %s1, %s177
    %179 = vst [vmem:[%s178] sm:%s176] %v174
    %s180 = scalar_lea.vmem [#allocation0], 64
    %v181 = vld [vmem:[%s180] sm:%s126]
    %s182 = sshll.u32 1, 2
    %s183 = ssub.s32 %s182, 1
    %s184 = smul.addr 2, 8
    %s185 = scalar_lea.vmem %s1, %s184
    %186 = vst [vmem:[%s185] sm:%s183] %v181
    %s187 = scalar_lea.vmem [#allocation0], 72
    %v188 = vld [vmem:[%s187] sm:%s126]
    %s189 = sshll.u32 1, 2
    %s190 = ssub.s32 %s189, 1
    %s191 = smul.addr 2, 9
    %s192 = scalar_lea.vmem %s1, %s191
    %193 = vst [vmem:[%s192] sm:%s190] %v188

// kernel: _forward.1
$region0: #{_forward.1}
  #allocation0 [shape = 'u32[]', space=smem, size = 0x4, offset = 0x4, fixed_abs, tag = 'smem constant byte address 0x4 - core index']
  #allocation1 [shape = 'u32[144,128]{1,0:T(1,128)}', space=vmem, size = 0x12000, scoped, tag = 'internal scratch']
  %s0 = inlined_call_operand.vmem [shape: f32[91,256], index: 0, kind: input, shape index: {}]
  %s1 = inlined_call_operand.vmem [shape: f32[4,91], index: 1, kind: input, shape index: {}]
  %s2 = inlined_call_operand.vmem [shape: f32[256,512], index: 2, kind: input, shape index: {}]
  %s3 = inlined_call_operand.vmem [shape: f32[2,5,256], index: 3, kind: output, shape index: {}]
  %s4 = sld [smem:[#allocation0]]
  $region22: #{_forward.1} parent=0
    _
  %s6 = ssub.s32 1, %s4
  %s7 = scalar_select 0, %s6, %s4
  // Predicated region
  $region2: #{_forward.1} parent=0 // pred_check
    _
  $region3: #{_forward.1} parent=0 // pred_check_branch
    %9 = sbr.rel (0) target = $region5
  $region4: #{_forward.1} parent=0 // pred_region
    _
  $region5: #{_forward.1} parent=0 // pred_fallthru
    _
  // Predicated region
  $region6: #{_forward.1} parent=0 // pred_check
    _
  $region7: #{_forward.1} parent=0 // pred_check_branch
    %11 = sbr.rel (0) target = $region9
  $region8: #{_forward.1} parent=0 // pred_region
    _
  $region9: #{_forward.1} parent=0 // pred_fallthru
    _
  // Predicated region
  $region10: #{_forward.1} parent=0 // pred_check
    _
  $region11: #{_forward.1} parent=0 // pred_check_branch
    %13 = sbr.rel (0) target = $region13
  $region12: #{_forward.1} parent=0 // pred_region
    _
  $region13: #{_forward.1} parent=0 // pred_fallthru
    _
  %v14 = vld [vmem:[%s1] sm:$0xf]
  %v15 = vld [vmem:[%s0] sm:$0xff]
  %v16 = vld [vmem:[%s0 + $0x8] sm:$0xff]
  %v17 = vld [vmem:[%s0 + $0x10] sm:$0xff]
  %v18 = vld [vmem:[%s0 + $0x18] sm:$0xff]
  %v19 = vld [vmem:[%s0 + $0x20] sm:$0xff]
  %v20 = vld [vmem:[%s0 + $0x28] sm:$0xff]
  %v21 = vld [vmem:[%s0 + $0x30] sm:$0xff]
  %v22 = vld [vmem:[%s0 + $0x38] sm:$0xff]
  %v23 = vld [vmem:[%s0 + $0x40] sm:$0xff]
  %v24 = vld [vmem:[%s0 + $0x48] sm:$0xff]
  %v25 = vld [vmem:[%s0 + $0x50] sm:$0xff]
  %v26 = vld [vmem:[%s0 + $0x58] sm:$0xff]
  %v27 = vld [vmem:[%s0 + $0x60] sm:$0xff]
  %v28 = vld [vmem:[%s0 + $0x68] sm:$0xff]
  %v29 = vld [vmem:[%s0 + $0x70] sm:$0xff]
  %v30 = vld [vmem:[%s0 + $0x78] sm:$0xff]
  %v31 = vld [vmem:[%s0 + $0x80] sm:$0xff]
  %v32 = vld [vmem:[%s0 + $0x88] sm:$0xff]
  %v33 = vld [vmem:[%s0 + $0x90] sm:$0xff]
  %v34 = vld [vmem:[%s0 + $0x98] sm:$0xff]
  %v35 = vld [vmem:[%s0 + $0xa0] sm:$0xff]
  %v36 = vld [vmem:[%s0 + $0xa8] sm:$0xff]
  %v37 = vld [vmem:[%s0 + $0xb0] sm:$0x7]
  %v38 = vld [vmem:[%s0 + $0xb8] sm:$0x7]
  %vm39 = vcmask 744448
  %v41 = vsel %vm39, %v14, 0
  %vm43 = vcmask 1042432
  %v45 = vsel %vm43, %v37, 0
  %v48 = vsel %vm43, %v38, 0
  %50 = vmatprep.subr.mxu0 0.0
  %51 = vmatpush1.msra.mxu0 0.0
  %52 = vmatprep.subr.mxu0 0.0
  %53 = vmatpush1.msra.mxu0 0.0
  %54 = vmatprep.subr.mxu0 0.0
  %55 = vmatpush1.msra.mxu0 0.0
  %56 = vmatprep.subr.mxu0 0.0
  %57 = vmatpush1.msra.mxu0 0.0
  %58 = vmatprep.subr.mxu0 %v48
  %59 = vmatpush1.msra.mxu0 %v45
  %60 = vmatprep.subr.mxu0 %v36
  %61 = vmatpush1.msra.mxu0 %v35
  %62 = vmatprep.subr.mxu0 %v34
  %63 = vmatpush1.msra.mxu0 %v33
  %64 = vmatprep.subr.mxu0 %v32
  %65 = vmatpush1.msra.mxu0 %v31
  %66 = vmatprep.subr.mxu0 %v30
  %67 = vmatpush1.msra.mxu0 %v29
  %68 = vmatprep.subr.mxu0 %v28
  %69 = vmatpush1.msra.mxu0 %v27
  %70 = vmatprep.subr.mxu0 %v26
  %71 = vmatpush1.msra.mxu0 %v25
  %72 = vmatprep.subr.mxu0 %v24
  %73 = vmatpush1.msra.mxu0 %v23
  %74 = vmatprep.subr.mxu0 %v22
  %75 = vmatpush1.msra.mxu0 %v21
  %76 = vmatprep.subr.mxu0 %v20
  %77 = vmatpush1.msra.mxu0 %v19
  %78 = vmatprep.subr.mxu0 %v18
  %79 = vmatpush1.msra.mxu0 %v17
  %80 = vmatprep.subr.mxu0 %v16
  %81 = vmatpush1.msra.mxu0 %v15
  %82 = vmatprep.subr.mxu0 0.0
  %83 = vmatpush2.msra.mxu0 0.0
  %84 = vmatprep.subr.mxu0 0.0
  %85 = vmatpush2.msra.mxu0 0.0
  %86 = vmatprep.subr.mxu0 0.0
  %87 = vmatpush2.msra.mxu0 0.0
  %88 = vmatprep.subr.mxu0 0.0
  %89 = vmatpush2.msra.mxu0 0.0
  %90 = vmatprep.subr.mxu0 0.0
  %91 = vmatpush2.msra.mxu0 0.0
  %92 = vmatprep.subr.mxu0 0.0
  %93 = vmatpush2.msra.mxu0 0.0
  %94 = vmatprep.subr.mxu0 0.0
  %95 = vmatpush2.msra.mxu0 0.0
  %96 = vmatprep.subr.mxu0 0.0
  %97 = vmatpush2.msra.mxu0 0.0
  %98 = vmatprep.subr.mxu0 0.0
  %99 = vmatpush2.msra.mxu0 0.0
  %100 = vmatprep.subr.mxu0 0.0
  %101 = vmatpush2.msra.mxu0 0.0
  %102 = vmatprep.subr.mxu0 0.0
  %103 = vmatpush2.msra.mxu0 0.0
  %104 = vmatprep.subr.mxu0 0.0
  %105 = vmatpush2.msra.mxu0 0.0
  %106 = vmatprep.subr.mxu0 0.0
  %107 = vmatpush2.msra.mxu0 0.0
  %108 = vmatprep.subr.mxu0 0.0
  %109 = vmatpush2.msra.mxu0 0.0
  %110 = vmatprep.subr.mxu0 0.0
  %111 = vmatpush2.msra.mxu0 0.0
  %112 = vmatprep.subr.mxu0 0.0
  %113 = vmatpush2.msra.mxu0 0.0
  %114 = vmatprep.mubr.f32.mxu0 0.0
  %115 = vmatmul.mubr.f32.gmra.mxu0 %v41
  %v116 = vpop.f32.mrf.mxu0
  %v117 = vadd.f32 0.0, %v116
  %v118 = vpop.f32.mrf.mxu0
  %v119 = vadd.f32 0.0, %v118
  %120 = vdwg.mxu0
  %v121 = vxor.u32 %v117, 2147483648
  %v122 = vxor.u32 %v119, 2147483648
  %v123 = vmul.f32 %v121, 1.442695
  %v124 = vpow.pop %v123
  %v125 = vmul.f32 %v122, 1.442695
  %v126 = vpow.pop %v125
  %v127 = vadd.f32 %v124, 1.0
  %v128 = vadd.f32 %v126, 1.0
  %v129 = vrcp.pop %v127
  %v130 = vmul.f32 1.0, %v129
  %v131 = vrcp.pop %v128
  %v132 = vmul.f32 1.0, %v131
  %v133 = vmul.f32 %v117, %v130
  %v134 = vmul.f32 %v119, %v132
  %135 = vst [vmem:[%s3] sm:$0xf] %v117
  %136 = vst [vmem:[%s3 + $0x8] sm:$0xf] %v119
  %s137 = scalar_lea.vmem %s3, 16
  %138 = vst [vmem:[%s137] sm:$0xf] %v133
  %139 = vst [vmem:[%s137 + $0x8] sm:$0xf] %v134
  %v140 = vld [vmem:[%s2] sm:$0xff]
  %v141 = vld [vmem:[%s2 + $0x8] sm:$0xff]
  %v142 = vld [vmem:[%s2 + $0x10] sm:$0xff]
  %v143 = vld [vmem:[%s2 + $0x18] sm:$0xff]
  %v144 = vld [vmem:[%s2 + $0x20] sm:$0xff]
  %v145 = vld [vmem:[%s2 + $0x28] sm:$0xff]
  %v146 = vld [vmem:[%s2 + $0x30] sm:$0xff]
  %v147 = vld [vmem:[%s2 + $0x38] sm:$0xff]
  %v148 = vld [vmem:[%s2 + $0x40] sm:$0xff]
  %v149 = vld [vmem:[%s2 + $0x48] sm:$0xff]
  %v150 = vld [vmem:[%s2 + $0x50] sm:$0xff]
  %v151 = vld [vmem:[%s2 + $0x58] sm:$0xff]
  %v152 = vld [vmem:[%s2 + $0x60] sm:$0xff]
  %v153 = vld [vmem:[%s2 + $0x68] sm:$0xff]
  %v154 = vld [vmem:[%s2 + $0x70] sm:$0xff]
  %v155 = vld [vmem:[%s2 + $0x78] sm:$0xff]
  %v156 = vld [vmem:[%s2 + $0x80] sm:$0xff]
  %v157 = vld [vmem:[%s2 + $0x88] sm:$0xff]
  %v158 = vld [vmem:[%s2 + $0x90] sm:$0xff]
  %v159 = vld [vmem:[%s2 + $0x98] sm:$0xff]
  %v160 = vld [vmem:[%s2 + $0xa0] sm:$0xff]
  %v161 = vld [vmem:[%s2 + $0xa8] sm:$0xff]
  %v162 = vld [vmem:[%s2 + $0xb0] sm:$0xff]
  %v163 = vld [vmem:[%s2 + $0xb8] sm:$0xff]
  %v164 = vld [vmem:[%s2 + $0xc0] sm:$0xff]
  %v165 = vld [vmem:[%s2 + $0xc8] sm:$0xff]
  %v166 = vld [vmem:[%s2 + $0xd0] sm:$0xff]
  %v167 = vld [vmem:[%s2 + $0xd8] sm:$0xff]
  %v168 = vld [vmem:[%s2 + $0xe0] sm:$0xff]
  %v169 = vld [vmem:[%s2 + $0xe8] sm:$0xff]
  %v170 = vld [vmem:[%s2 + $0xf0] sm:$0xff]
  %v171 = vld [vmem:[%s2 + $0xf8] sm:$0xff]
  %v172 = vld [vmem:[%s2 + $0x100] sm:$0xff]
  %v173 = vld [vmem:[%s2 + $0x108] sm:$0xff]
  %v174 = vld [vmem:[%s2 + $0x110] sm:$0xff]
  %v175 = vld [vmem:[%s2 + $0x118] sm:$0xff]
  %v176 = vld [vmem:[%s2 + $0x120] sm:$0xff]
  %v177 = vld [vmem:[%s2 + $0x128] sm:$0xff]
  %v178 = vld [vmem:[%s2 + $0x130] sm:$0xff]
  %v179 = vld [vmem:[%s2 + $0x138] sm:$0xff]
  %v180 = vld [vmem:[%s2 + $0x140] sm:$0xff]
  %v181 = vld [vmem:[%s2 + $0x148] sm:$0xff]
  %v182 = vld [vmem:[%s2 + $0x150] sm:$0xff]
  %v183 = vld [vmem:[%s2 + $0x158] sm:$0xff]
  %v184 = vld [vmem:[%s2 + $0x160] sm:$0xff]
  %v185 = vld [vmem:[%s2 + $0x168] sm:$0xff]
  %v186 = vld [vmem:[%s2 + $0x170] sm:$0xff]
  %v187 = vld [vmem:[%s2 + $0x178] sm:$0xff]
  %v188 = vld [vmem:[%s2 + $0x180] sm:$0xff]
  %v189 = vld [vmem:[%s2 + $0x188] sm:$0xff]
  %v190 = vld [vmem:[%s2 + $0x190] sm:$0xff]
  %v191 = vld [vmem:[%s2 + $0x198] sm:$0xff]
  %v192 = vld [vmem:[%s2 + $0x1a0] sm:$0xff]
  %v193 = vld [vmem:[%s2 + $0x1a8] sm:$0xff]
  %v194 = vld [vmem:[%s2 + $0x1b0] sm:$0xff]
  %v195 = vld [vmem:[%s2 + $0x1b8] sm:$0xff]
  %v196 = vld [vmem:[%s2 + $0x1c0] sm:$0xff]
  %v197 = vld [vmem:[%s2 + $0x1c8] sm:$0xff]
  %v198 = vld [vmem:[%s2 + $0x1d0] sm:$0xff]
  %v199 = vld [vmem:[%s2 + $0x1d8] sm:$0xff]
  %v200 = vld [vmem:[%s2 + $0x1e0] sm:$0xff]
  %v201 = vld [vmem:[%s2 + $0x1e8] sm:$0xff]
  %v202 = vld [vmem:[%s2 + $0x1f0] sm:$0xff]
  %v203 = vld [vmem:[%s2 + $0x1f8] sm:$0xff]
  %v204 = vld [vmem:[%s2 + $0x200] sm:$0xff]
  %v205 = vld [vmem:[%s2 + $0x208] sm:$0xff]
  %v206 = vld [vmem:[%s2 + $0x210] sm:$0xff]
  %v207 = vld [vmem:[%s2 + $0x218] sm:$0xff]
  %v208 = vld [vmem:[%s2 + $0x220] sm:$0xff]
  %v209 = vld [vmem:[%s2 + $0x228] sm:$0xff]
  %v210 = vld [vmem:[%s2 + $0x230] sm:$0xff]
  %v211 = vld [vmem:[%s2 + $0x238] sm:$0xff]
  %v212 = vld [vmem:[%s2 + $0x240] sm:$0xff]
  %v213 = vld [vmem:[%s2 + $0x248] sm:$0xff]
  %v214 = vld [vmem:[%s2 + $0x250] sm:$0xff]
  %v215 = vld [vmem:[%s2 + $0x258] sm:$0xff]
  %v216 = vld [vmem:[%s2 + $0x260] sm:$0xff]
  %v217 = vld [vmem:[%s2 + $0x268] sm:$0xff]
  %v218 = vld [vmem:[%s2 + $0x270] sm:$0xff]
  %v219 = vld [vmem:[%s2 + $0x278] sm:$0xff]
  %v220 = vld [vmem:[%s2 + $0x280] sm:$0xff]
  %v221 = vld [vmem:[%s2 + $0x288] sm:$0xff]
  %v222 = vld [vmem:[%s2 + $0x290] sm:$0xff]
  %v223 = vld [vmem:[%s2 + $0x298] sm:$0xff]
  %v224 = vld [vmem:[%s2 + $0x2a0] sm:$0xff]
  %v225 = vld [vmem:[%s2 + $0x2a8] sm:$0xff]
  %v226 = vld [vmem:[%s2 + $0x2b0] sm:$0xff]
  %v227 = vld [vmem:[%s2 + $0x2b8] sm:$0xff]
  %v228 = vld [vmem:[%s2 + $0x2c0] sm:$0xff]
  %v229 = vld [vmem:[%s2 + $0x2c8] sm:$0xff]
  %v230 = vld [vmem:[%s2 + $0x2d0] sm:$0xff]
  %v231 = vld [vmem:[%s2 + $0x2d8] sm:$0xff]
  %v232 = vld [vmem:[%s2 + $0x2e0] sm:$0xff]
  %v233 = vld [vmem:[%s2 + $0x2e8] sm:$0xff]
  %v234 = vld [vmem:[%s2 + $0x2f0] sm:$0xff]
  %v235 = vld [vmem:[%s2 + $0x2f8] sm:$0xff]
  %v236 = vld [vmem:[%s2 + $0x300] sm:$0xff]
  %v237 = vld [vmem:[%s2 + $0x308] sm:$0xff]
  %v238 = vld [vmem:[%s2 + $0x310] sm:$0xff]
  %v239 = vld [vmem:[%s2 + $0x318] sm:$0xff]
  %v240 = vld [vmem:[%s2 + $0x320] sm:$0xff]
  %v241 = vld [vmem:[%s2 + $0x328] sm:$0xff]
  %v242 = vld [vmem:[%s2 + $0x330] sm:$0xff]
  %v243 = vld [vmem:[%s2 + $0x338] sm:$0xff]
  %v244 = vld [vmem:[%s2 + $0x340] sm:$0xff]
  %v245 = vld [vmem:[%s2 + $0x348] sm:$0xff]
  %v246 = vld [vmem:[%s2 + $0x350] sm:$0xff]
  %v247 = vld [vmem:[%s2 + $0x358] sm:$0xff]
  %v248 = vld [vmem:[%s2 + $0x360] sm:$0xff]
  %v249 = vld [vmem:[%s2 + $0x368] sm:$0xff]
  %v250 = vld [vmem:[%s2 + $0x370] sm:$0xff]
  %v251 = vld [vmem:[%s2 + $0x378] sm:$0xff]
  %v252 = vld [vmem:[%s2 + $0x380] sm:$0xff]
  %v253 = vld [vmem:[%s2 + $0x388] sm:$0xff]
  %v254 = vld [vmem:[%s2 + $0x390] sm:$0xff]
  %v255 = vld [vmem:[%s2 + $0x398] sm:$0xff]
  %v256 = vld [vmem:[%s2 + $0x3a0] sm:$0xff]
  %v257 = vld [vmem:[%s2 + $0x3a8] sm:$0xff]
  %v258 = vld [vmem:[%s2 + $0x3b0] sm:$0xff]
  %v259 = vld [vmem:[%s2 + $0x3b8] sm:$0xff]
  %v260 = vld [vmem:[%s2 + $0x3c0] sm:$0xff]
  %v261 = vld [vmem:[%s2 + $0x3c8] sm:$0xff]
  %v262 = vld [vmem:[%s2 + $0x3d0] sm:$0xff]
  %v263 = vld [vmem:[%s2 + $0x3d8] sm:$0xff]
  %v264 = vld [vmem:[%s2 + $0x3e0] sm:$0xff]
  %v265 = vld [vmem:[%s2 + $0x3e8] sm:$0xff]
  %v266 = vld [vmem:[%s2 + $0x3f0] sm:$0xff]
  %v267 = vld [vmem:[%s2 + $0x3f8] sm:$0xff]
  %268 = vmatprep.subr.mxu0 %v201
  %269 = vmatpush1.msra.mxu0 %v200
  %270 = vmatprep.subr.mxu0 %v197
  %271 = vmatpush1.msra.mxu0 %v196
  %272 = vmatprep.subr.mxu0 %v193
  %273 = vmatpush1.msra.mxu0 %v192
  %274 = vmatprep.subr.mxu0 %v189
  %275 = vmatpush1.msra.mxu0 %v188
  %276 = vmatprep.subr.mxu0 %v185
  %277 = vmatpush1.msra.mxu0 %v184
  %278 = vmatprep.subr.mxu0 %v181
  %279 = vmatpush1.msra.mxu0 %v180
  %280 = vmatprep.subr.mxu0 %v177
  %281 = vmatpush1.msra.mxu0 %v176
  %282 = vmatprep.subr.mxu0 %v173
  %283 = vmatpush1.msra.mxu0 %v172
  %284 = vmatprep.subr.mxu0 %v169
  %285 = vmatpush1.msra.mxu0 %v168
  %286 = vmatprep.subr.mxu0 %v165
  %287 = vmatpush1.msra.mxu0 %v164
  %288 = vmatprep.subr.mxu0 %v161
  %289 = vmatpush1.msra.mxu0 %v160
  %290 = vmatprep.subr.mxu0 %v157
  %291 = vmatpush1.msra.mxu0 %v156
  %292 = vmatprep.subr.mxu0 %v153
  %293 = vmatpush1.msra.mxu0 %v152
  %294 = vmatprep.subr.mxu0 %v149
  %295 = vmatpush1.msra.mxu0 %v148
  %296 = vmatprep.subr.mxu0 %v145
  %297 = vmatpush1.msra.mxu0 %v144
  %298 = vmatprep.subr.mxu0 %v141
  %299 = vmatpush1.msra.mxu0 %v140
  %300 = vmatprep.subr.mxu0 %v265
  %301 = vmatpush2.msra.mxu0 %v264
  %302 = vmatprep.subr.mxu0 %v261
  %303 = vmatpush2.msra.mxu0 %v260
  %304 = vmatprep.subr.mxu0 %v257
  %305 = vmatpush2.msra.mxu0 %v256
  %306 = vmatprep.subr.mxu0 %v253
  %307 = vmatpush2.msra.mxu0 %v252
  %308 = vmatprep.subr.mxu0 %v249
  %309 = vmatpush2.msra.mxu0 %v248
  %310 = vmatprep.subr.mxu0 %v245
  %311 = vmatpush2.msra.mxu0 %v244
  %312 = vmatprep.subr.mxu0 %v241
  %313 = vmatpush2.msra.mxu0 %v240
  %314 = vmatprep.subr.mxu0 %v237
  %315 = vmatpush2.msra.mxu0 %v236
  %316 = vmatprep.subr.mxu0 %v233
  %317 = vmatpush2.msra.mxu0 %v232
  %318 = vmatprep.subr.mxu0 %v229
  %319 = vmatpush2.msra.mxu0 %v228
  %320 = vmatprep.subr.mxu0 %v225
  %321 = vmatpush2.msra.mxu0 %v224
  %322 = vmatprep.subr.mxu0 %v221
  %323 = vmatpush2.msra.mxu0 %v220
  %324 = vmatprep.subr.mxu0 %v217
  %325 = vmatpush2.msra.mxu0 %v216
  %326 = vmatprep.subr.mxu0 %v213
  %327 = vmatpush2.msra.mxu0 %v212
  %328 = vmatprep.subr.mxu0 %v209
  %329 = vmatpush2.msra.mxu0 %v208
  %330 = vmatprep.subr.mxu0 %v205
  %331 = vmatpush2.msra.mxu0 %v204
  %332 = vmatprep.mubr.f32.mxu0 %v134
  %333 = vmatmul.mubr.f32.gmra.mxu0 %v133
  %v334 = vpop.f32.mrf.mxu0
  %v335 = vadd.f32 0.0, %v334
  %v336 = vpop.f32.mrf.mxu0
  %v337 = vadd.f32 0.0, %v336
  %338 = vdwg.mxu0
  %339 = vmatprep.subr.mxu0 %v203
  %340 = vmatpush1.msra.mxu0 %v202
  %341 = vmatprep.subr.mxu0 %v199
  %342 = vmatpush1.msra.mxu0 %v198
  %343 = vmatprep.subr.mxu0 %v195
  %344 = vmatpush1.msra.mxu0 %v194
  %345 = vmatprep.subr.mxu0 %v191
  %346 = vmatpush1.msra.mxu0 %v190
  %347 = vmatprep.subr.mxu0 %v187
  %348 = vmatpush1.msra.mxu0 %v186
  %349 = vmatprep.subr.mxu0 %v183
  %350 = vmatpush1.msra.mxu0 %v182
  %351 = vmatprep.subr.mxu0 %v179
  %352 = vmatpush1.msra.mxu0 %v178
  %353 = vmatprep.subr.mxu0 %v175
  %354 = vmatpush1.msra.mxu0 %v174
  %355 = vmatprep.subr.mxu0 %v171
  %356 = vmatpush1.msra.mxu0 %v170
  %357 = vmatprep.subr.mxu0 %v167
  %358 = vmatpush1.msra.mxu0 %v166
  %359 = vmatprep.subr.mxu0 %v163
  %360 = vmatpush1.msra.mxu0 %v162
  %361 = vmatprep.subr.mxu0 %v159
  %362 = vmatpush1.msra.mxu0 %v158
  %363 = vmatprep.subr.mxu0 %v155
  %364 = vmatpush1.msra.mxu0 %v154
  %365 = vmatprep.subr.mxu0 %v151
  %366 = vmatpush1.msra.mxu0 %v150
  %367 = vmatprep.subr.mxu0 %v147
  %368 = vmatpush1.msra.mxu0 %v146
  %369 = vmatprep.subr.mxu0 %v143
  %370 = vmatpush1.msra.mxu0 %v142
  %371 = vmatprep.subr.mxu0 %v267
  %372 = vmatpush2.msra.mxu0 %v266
  %373 = vmatprep.subr.mxu0 %v263
  %374 = vmatpush2.msra.mxu0 %v262
  %375 = vmatprep.subr.mxu0 %v259
  %376 = vmatpush2.msra.mxu0 %v258
  %377 = vmatprep.subr.mxu0 %v255
  %378 = vmatpush2.msra.mxu0 %v254
  %379 = vmatprep.subr.mxu0 %v251
  %380 = vmatpush2.msra.mxu0 %v250
  %381 = vmatprep.subr.mxu0 %v247
  %382 = vmatpush2.msra.mxu0 %v246
  %383 = vmatprep.subr.mxu0 %v243
  %384 = vmatpush2.msra.mxu0 %v242
  %385 = vmatprep.subr.mxu0 %v239
  %386 = vmatpush2.msra.mxu0 %v238
  %387 = vmatprep.subr.mxu0 %v235
  %388 = vmatpush2.msra.mxu0 %v234
  %389 = vmatprep.subr.mxu0 %v231
  %390 = vmatpush2.msra.mxu0 %v230
  %391 = vmatprep.subr.mxu0 %v227
  %392 = vmatpush2.msra.mxu0 %v226
  %393 = vmatprep.subr.mxu0 %v223
  %394 = vmatpush2.msra.mxu0 %v222
  %395 = vmatprep.subr.mxu0 %v219
  %396 = vmatpush2.msra.mxu0 %v218
  %397 = vmatprep.subr.mxu0 %v215
  %398 = vmatpush2.msra.mxu0 %v214
  %399 = vmatprep.subr.mxu0 %v211
  %400 = vmatpush2.msra.mxu0 %v210
  %401 = vmatprep.subr.mxu0 %v207
  %402 = vmatpush2.msra.mxu0 %v206
  %403 = vmatprep.mubr.f32.mxu0 %v134
  %404 = vmatmul.mubr.f32.gmra.mxu0 %v133
  %v405 = vpop.f32.mrf.mxu0
  %v406 = vadd.f32 0.0, %v405
  %v407 = vpop.f32.mrf.mxu0
  %v408 = vadd.f32 0.0, %v407
  %409 = vdwg.mxu0
  %v411 = vrot.slane %v337, 1
  %v413 = vadd.f32 %v335, %v411
  %v415 = vrot.slane %v406, 2
  %v417 = vadd.f32 %v413, %v415
  %v419 = vrot.slane %v408, 3
  %v421 = vadd.f32 %v417, %v419
  %v422 = vxor.u32 %v421, 2147483648
  %v423 = vmul.f32 %v422, 1.442695
  %v424 = vpow.pop %v423
  %v425 = vadd.f32 %v424, 1.0
  %v426 = vrcp.pop %v425
  %v427 = vmul.f32 1.0, %v426
  %v428 = vmul.f32 %v421, %v427
  %429 = vst [vmem:[%s3 + $0x4] sm:$0x1] %v421
  %430 = vst [vmem:[%s137 + $0x4] sm:$0x1] %v428
  // Predicated region
  $region14: #{_forward.1} parent=0 // pred_check
    _
  $region15: #{_forward.1} parent=0 // pred_check_branch
    %432 = sbr.rel (0) target = $region17
  $region16: #{_forward.1} parent=0 // pred_region
    _
  $region17: #{_forward.1} parent=0 // pred_fallthru
    _
  // Predicated region
  $region18: #{_forward.1} parent=0 // pred_check
    _
  $region19: #{_forward.1} parent=0 // pred_check_branch
    %434 = sbr.rel (0) target = $region21
  $region20: #{_forward.1} parent=0 // pred_region
    _
  $region21: #{_forward.1} parent=0 // pred_fallthru
    _

</llo_original>
